<compile_context>
chip_gen: v7x
topology: tpu7x:2x2x1
jax: 0.10.0
libtpu: 0.0.40
codegen_flags: <defaults>
</compile_context>

<pallas_src>
import jax
import jax.numpy as jnp
from jax.experimental import pallas as pl
from jax.experimental.pallas import tpu as pltpu

LANES = 128
_SUBLANE_PACK = 32                 # lcm of f32(8) / bf16(16) / int8(32) sublane packing
_TARGET_BLOCK_BYTES = 1 << 20      # ~1 MiB per input per pipeline buffer (v5e-safe)
_FAST_PATH_BYTES = 1 << 20         # below this many streamed bytes, skip Pallas


def _round_up(x, m):
    return ((x + m - 1) // m) * m


def _partial_sums(x, t):
    """[sum(p*t), sum(p)+sum(t), sum(per-element BCE)] for one tile (f32 math)."""
    x = x.astype(jnp.float32)
    t = t.astype(jnp.float32)

    # Stable sigmoid sharing a single exp with the BCE softplus term.
    z = jnp.exp(-jnp.abs(x))            # EUP
    inv = 1.0 / (1.0 + z)               # exact VPU divide (EUP already holds exp+log1p)
    p = jnp.where(x >= 0.0, inv, z * inv)

    # BCE identity: -(t*log(p) + (1-t)*log(1-p)) == max(x,0) - x*t + log1p(exp(-|x|)).
    # Clipping x to [-100, 100] reproduces torch's clamp of the log terms at -100.
    xc = jnp.clip(x, -100.0, 100.0)
    bce = jnp.maximum(xc, 0.0) - xc * t + jnp.log1p(z)

    return jnp.sum(p * t), jnp.sum(p + t), jnp.sum(bce)


def _make_kernel(block_rows, num_blocks, tail_rows):
    has_partial_tail = tail_rows != block_rows   # static (Python) decision

    def kernel(x_ref, t_ref, out_ref):
        def emit(s_pt, s_ppt, s_bce):
            out_ref[0, 0] = s_pt
            out_ref[0, 1] = s_ppt
            out_ref[0, 2] = s_bce

        if not has_partial_tail:
            emit(*_partial_sums(x_ref[...], t_ref[...]))
        else:
            last = num_blocks - 1

            @pl.when(pl.program_id(0) != last)
            def _full_block():
                emit(*_partial_sums(x_ref[...], t_ref[...]))

            @pl.when(pl.program_id(0) == last)
            def _tail_block():
                # Rows >= tail_rows of the final block are out-of-bounds garbage:
                # replace with a sentinel that contributes exactly 0 to every sum.
                x = x_ref[...].astype(jnp.float32)
                t = t_ref[...].astype(jnp.float32)
                row = jax.lax.broadcasted_iota(jnp.int32, x.shape, 0)
                keep = row < tail_rows
                x = jnp.where(keep, x, -1e9)     # sigmoid -> 0, bce -> 0
                t = jnp.where(keep, t, 0.0)
                emit(*_partial_sums(x, t))

    return kernel


def _dice_bce_sums_pallas(x_flat, t_flat, n_valid):
    """Streams flattened logits/targets through the kernel; returns the 3 sums."""
    rem = n_valid % LANES
    if rem:
        # Rare fallback (flat size not lane-divisible): pad by <=127 sentinel
        # elements (sigmoid(-1e9)=0 with target 0 contributes exactly 0).
        pad = LANES - rem
        x_flat = jnp.pad(x_flat, (0, pad), constant_values=-1e9)
        t_flat = jnp.pad(t_flat, (0, pad), constant_values=0)

    rows = x_flat.shape[0] // LANES
    itemsize = max(x_flat.dtype.itemsize, t_flat.dtype.itemsize)
    rows_cap = max(_SUBLANE_PACK,
                   (_TARGET_BLOCK_BYTES // (LANES * itemsize))
                   // _SUBLANE_PACK * _SUBLANE_PACK)

    if rows <= rows_cap:
        block_rows, num_blocks = rows, 1          # full-dim block: always legal
    else:
        n_b = pl.cdiv(rows, rows_cap)             # balanced blocks -> tiny tail
        block_rows = _round_up(pl.cdiv(rows, n_b), _SUBLANE_PACK)
        num_blocks = pl.cdiv(rows, block_rows)
    tail_rows = rows - (num_blocks - 1) * block_rows

    x2d = x_flat.reshape(rows, LANES)             # row-major reshape: no copy
    t2d = t_flat.reshape(rows, LANES)

    partials = pl.pallas_call(
        _make_kernel(block_rows, num_blocks, tail_rows),
        out_shape=jax.ShapeDtypeStruct((num_blocks, 3), jnp.float32),
        grid=(num_blocks,),
        in_specs=[
            pl.BlockSpec((block_rows, LANES), lambda i: (i, 0)),
            pl.BlockSpec((block_rows, LANES), lambda i: (i, 0)),
        ],
        out_specs=pl.BlockSpec((1, 3), lambda i: (i, 0),
                               memory_space=pltpu.SMEM),
        compiler_params=pltpu.CompilerParams(
            # Independent per-block partials -> grid axis is fully parallel.
            # TODO(synk): switch to pltpu.CORE_PARALLEL if v7x profiling ever
            # shows only one TensorCore streaming.
            dimension_semantics=("parallel",)),
    )(x2d, t2d)
    return jnp.sum(partials, axis=0)


def dice_bce_loss_pallas(inputs, targets, smooth=1.0):
    """DiceBCELoss.forward via the Pallas streaming-reduction kernel."""
    n_valid = int(inputs.size)
    if n_valid == 0:
        return jnp.float32(jnp.nan)   # torch: mean over an empty tensor is nan

    x_flat = jnp.ravel(inputs)        # row-major, matches torch .view(-1)
    t_flat = jnp.ravel(targets)
    if t_flat.dtype == jnp.bool_:
        # Keep the 1-byte HBM footprint; int8 is the Pallas-friendly form of bool.
        t_flat = t_flat.astype(jnp.int8)

    s = _dice_bce_sums_pallas(x_flat, t_flat, n_valid)
    intersection, p_plus_t, bce_sum = s[0], s[1], s[2]
    smooth = jnp.float32(smooth)
    dice_loss = 1.0 - (2.0 * intersection + smooth) / (p_plus_t + smooth)
    return bce_sum / jnp.float32(n_valid) + dice_loss


def _dice_bce_loss_xla(inputs, targets, smooth):
    """Fused pure-XLA path (also the reference): mirrors the PyTorch forward."""
    p = jax.nn.sigmoid(inputs.astype(jnp.float32)).reshape(-1)
    t = targets.astype(jnp.float32).reshape(-1)
    intersection = jnp.sum(p * t)
    dice_loss = 1.0 - (2.0 * intersection + smooth) / (jnp.sum(p) + jnp.sum(t) + smooth)
    log_p = jnp.maximum(jnp.log(p), -100.0)           # torch's -100 clamp
    log_1mp = jnp.maximum(jnp.log(1.0 - p), -100.0)
    bce = jnp.mean(-(t * log_p + (1.0 - t) * log_1mp))
    return bce + dice_loss


def dice_bce_loss(inputs, targets, smooth=1.0):
    """Public entry point: Pallas kernel for large inputs, fused XLA for small."""
    n_valid = int(inputs.size)
    if n_valid == 0:
        return jnp.float32(jnp.nan)
    total_bytes = n_valid * (inputs.dtype.itemsize + targets.dtype.itemsize)
    if total_bytes < _FAST_PATH_BYTES:
        return _dice_bce_loss_xla(inputs, targets, jnp.float32(smooth))
    return dice_bce_loss_pallas(inputs, targets, smooth)


def dice_bce_loss_ref(inputs, targets, smooth=1.0):
    return _dice_bce_loss_xla(inputs, targets, jnp.float32(smooth))


if __name__ == "__main__":
    # DiceBCELoss has no learnable parameters (the `weight` ctor arg is unused).
    key = jax.random.PRNGKey(0)
    k1, k2, k3, k4, k5, k6 = jax.random.split(key, 6)

    def check(name, got, want, rtol, atol):
        assert jnp.allclose(got, want, rtol=rtol, atol=atol), (name, got, want)

    # 1) Small 4-channel segmentation batch (kernel forced; single full block).
    x1 = jax.random.normal(k1, (2, 4, 16, 16), dtype=jnp.float32)
    t1 = jax.random.bernoulli(k2, 0.5, (2, 4, 16, 16)).astype(jnp.float32)
    out1 = jax.block_until_ready(dice_bce_loss_pallas(x1, t1, smooth=1.0))
    check("small", out1, dice_bce_loss_ref(x1, t1, 1.0), 1e-5, 1e-5)

    # 2) Larger batch: multi-block parallel grid + in-kernel tail-row masking.
    #    (Looser tolerance: f32 reduction-order differences over ~3e5 elements.)
    x2 = jax.random.normal(k3, (2, 4, 325, 128), dtype=jnp.float32)
    t2 = jax.random.bernoulli(k4, 0.3, (2, 4, 325, 128)).astype(jnp.float32)
    out2 = jax.block_until_ready(dice_bce_loss_pallas(x2, t2, smooth=1.0))
    check("masked-tail", out2, dice_bce_loss_ref(x2, t2, 1.0), 1e-4, 1e-4)

    # 2b) Same logits, int8 {0,1} targets streamed natively (no wrapper upcast).
    t2_i8 = t2.astype(jnp.int8)
    out2b = jax.block_until_ready(dice_bce_loss_pallas(x2, t2_i8, smooth=1.0))
    check("int8-targets", out2b, dice_bce_loss_ref(x2, t2, 1.0), 1e-4, 1e-4)

    # 3) Non-lane-divisible size: exercises the minimal 128-alignment fallback.
    x3 = jax.random.normal(k5, (2, 4, 15, 15), dtype=jnp.float32)
    t3 = jax.random.bernoulli(k6, 0.5, (2, 4, 15, 15)).astype(jnp.float32)
    out3 = jax.block_until_ready(dice_bce_loss_pallas(x3, t3, smooth=1.0))
    check("unaligned", out3, dice_bce_loss_ref(x3, t3, 1.0), 1e-5, 1e-5)

    # 4) Public dispatcher: small -> fused XLA fast path, large -> Pallas kernel.
    outs = jax.block_until_ready(dice_bce_loss(x1, t1, smooth=1.0))
    check("dispatch-small", outs, dice_bce_loss_ref(x1, t1, 1.0), 1e-5, 1e-5)
    outl = jax.block_until_ready(dice_bce_loss(x2, t2, smooth=1.0))
    check("dispatch-large", outl, dice_bce_loss_ref(x2, t2, 1.0), 1e-4, 1e-4)

    print("KERNEL_OK")
</pallas_src>

<mosaic_0001>
module attributes {stable_mosaic.version = 11 : i64} {
  func.func @kernel(%arg0: i32, %arg1: memref<16x128xf32, #tpu.memory_space<vmem>>, %arg2: memref<16x128xf32, #tpu.memory_space<vmem>>, %arg3: memref<1x3xf32, #tpu.memory_space<smem>>) attributes {dimension_semantics = [#tpu.dimension_semantics<parallel>], iteration_bounds = array<i64: 1>, scalar_prefetch = 0 : i64, scratch_operands = 0 : i64, tpu.core_type = #tpu.core_type<tc>, window_params = [{transform_indices = @transform_0, window_bounds = array<i64: 16, 128>}, {transform_indices = @transform_1, window_bounds = array<i64: 16, 128>}, {transform_indices = @transform_2, window_bounds = array<i64: 1, 3>}]} {
    %c0 = arith.constant 0 : index
    %c0_0 = arith.constant 0 : index
    %0 = vector.load %arg1[%c0, %c0_0] : memref<16x128xf32, #tpu.memory_space<vmem>>, vector<16x128xf32>
    %c0_1 = arith.constant 0 : index
    %c0_2 = arith.constant 0 : index
    %1 = vector.load %arg2[%c0_1, %c0_2] : memref<16x128xf32, #tpu.memory_space<vmem>>, vector<16x128xf32>
    %2 = math.absf %0 : vector<16x128xf32>
    %cst = arith.constant 0.000000e+00 : f32
    %3 = vector.broadcast %cst : f32 to vector<16x128xf32>
    %4 = arith.subf %3, %2 : vector<16x128xf32>
    %5 = math.exp %4 : vector<16x128xf32>
    %cst_3 = arith.constant 1.000000e+00 : f32
    %6 = vector.broadcast %cst_3 : f32 to vector<16x128xf32>
    %7 = arith.addf %6, %5 : vector<16x128xf32>
    %cst_4 = arith.constant 1.000000e+00 : f32
    %8 = vector.broadcast %cst_4 : f32 to vector<16x128xf32>
    %9 = arith.divf %8, %7 : vector<16x128xf32>
    %cst_5 = arith.constant 0.000000e+00 : f32
    %10 = vector.broadcast %cst_5 : f32 to vector<16x128xf32>
    %11 = arith.cmpf oge, %0, %10 : vector<16x128xf32>
    %12 = arith.mulf %5, %9 : vector<16x128xf32>
    %13 = arith.select %11, %9, %12 : vector<16x128xi1>, vector<16x128xf32>
    %cst_6 = arith.constant -1.000000e+02 : f32
    %cst_7 = arith.constant 1.000000e+02 : f32
    %14 = vector.broadcast %cst_6 : f32 to vector<16x128xf32>
    %15 = arith.maximumf %14, %0 : vector<16x128xf32>
    %16 = vector.broadcast %cst_7 : f32 to vector<16x128xf32>
    %17 = arith.minimumf %16, %15 : vector<16x128xf32>
    %cst_8 = arith.constant 0.000000e+00 : f32
    %18 = vector.broadcast %cst_8 : f32 to vector<16x128xf32>
    %19 = arith.maximumf %17, %18 : vector<16x128xf32>
    %20 = arith.mulf %17, %1 : vector<16x128xf32>
    %21 = arith.subf %19, %20 : vector<16x128xf32>
    %22 = math.log1p %5 : vector<16x128xf32>
    %23 = arith.addf %21, %22 : vector<16x128xf32>
    %24 = arith.mulf %13, %1 : vector<16x128xf32>
    %25 = vector.shape_cast %24 : vector<16x128xf32> to vector<1x16x128xf32>
    %cst_9 = arith.constant dense<0.000000e+00> : vector<1xf32>
    %26 = vector.multi_reduction <add>, %25, %cst_9 [1, 2] : vector<1x16x128xf32> to vector<1xf32>
    %27 = vector.shape_cast %26 : vector<1xf32> to vector<1x1x1xf32>
    %28 = vector.extract %27[0, 0, 0] : f32 from vector<1x1x1xf32>
    %29 = arith.addf %13, %1 : vector<16x128xf32>
    %30 = vector.shape_cast %29 : vector<16x128xf32> to vector<1x16x128xf32>
    %cst_10 = arith.constant dense<0.000000e+00> : vector<1xf32>
    %31 = vector.multi_reduction <add>, %30, %cst_10 [1, 2] : vector<1x16x128xf32> to vector<1xf32>
    %32 = vector.shape_cast %31 : vector<1xf32> to vector<1x1x1xf32>
    %33 = vector.extract %32[0, 0, 0] : f32 from vector<1x1x1xf32>
    %34 = vector.shape_cast %23 : vector<16x128xf32> to vector<1x16x128xf32>
    %cst_11 = arith.constant dense<0.000000e+00> : vector<1xf32>
    %35 = vector.multi_reduction <add>, %34, %cst_11 [1, 2] : vector<1x16x128xf32> to vector<1xf32>
    %36 = vector.shape_cast %35 : vector<1xf32> to vector<1x1x1xf32>
    %37 = vector.extract %36[0, 0, 0] : f32 from vector<1x1x1xf32>
    %c0_12 = arith.constant 0 : index
    %c0_13 = arith.constant 0 : index
    %38 = memref.load %arg3[%c0_12, %c0_13] : memref<1x3xf32, #tpu.memory_space<smem>>
    memref.store %28, %arg3[%c0_12, %c0_13] : memref<1x3xf32, #tpu.memory_space<smem>>
    %c0_14 = arith.constant 0 : index
    %c1 = arith.constant 1 : index
    %39 = memref.load %arg3[%c0_14, %c1] : memref<1x3xf32, #tpu.memory_space<smem>>
    memref.store %33, %arg3[%c0_14, %c1] : memref<1x3xf32, #tpu.memory_space<smem>>
    %c0_15 = arith.constant 0 : index
    %c2 = arith.constant 2 : index
    %40 = memref.load %arg3[%c0_15, %c2] : memref<1x3xf32, #tpu.memory_space<smem>>
    memref.store %37, %arg3[%c0_15, %c2] : memref<1x3xf32, #tpu.memory_space<smem>>
    return
  }
  func.func @transform_0(%arg0: i32) -> (i32, i32) {
    %c0_i32 = arith.constant 0 : i32
    %c0_i32_0 = arith.constant 0 : i32
    return %arg0, %c0_i32 : i32, i32
  }
  func.func @transform_1(%arg0: i32) -> (i32, i32) {
    %c0_i32 = arith.constant 0 : i32
    %c0_i32_0 = arith.constant 0 : i32
    return %arg0, %c0_i32 : i32, i32
  }
  func.func @transform_2(%arg0: i32) -> (i32, i32) {
    %c0_i32 = arith.constant 0 : i32
    %c0_i32_0 = arith.constant 0 : i32
    return %arg0, %c0_i32 : i32, i32
  }
}

</mosaic_0001>

<llo_original>
// kernel: tpu_custom_call.1
$region0: #{tpu_custom_call.1}
  #allocation0 [shape = 'u32[]', space=smem, size = 0x4, offset = 0x4, fixed_abs, tag = 'smem constant byte address 0x4 - core index']
  #allocation1 [shape = 'u32[144,128]{1,0:T(1,128)}', space=vmem, size = 0x12000, scoped, tag = 'internal scratch']
  %s0 = inlined_call_operand.hbm [shape: f32[16,128], index: 0, kind: input, shape index: {}]
  %s1 = inlined_call_operand.hbm [shape: f32[16,128], index: 1, kind: input, shape index: {}]
  %s2 = inlined_call_operand.hbm [shape: f32[1,3], index: 2, kind: output, shape index: {}]
  %s3 = sld [smem:[#allocation0]]
  $region26: #{tpu_custom_call.1} parent=0
    _
  %s5 = ssub.s32 1, %s3
  %s6 = scalar_select 0, %s5, %s3
  $region1: #{tpu_custom_call.1} parent=0
    #allocation2 [shape = 'u8[8192]{0}', space=vmem, size = 0x2000, scoped, tag = 'input window, operand 0, single buffered']
    #allocation3 [shape = 's32[1]{0}', space=sflag, size = 0x4, scoped, tag = 'scoped memory for tpu_custom_call.1']
    #allocation4 [shape = 's32[1]{0}', space=sflag, size = 0x4, scoped, tag = 'scoped memory for tpu_custom_call.1']
    #allocation5 [shape = 'u8[8192]{0}', space=vmem, size = 0x2000, scoped, tag = 'input window, operand 1, single buffered']
    #allocation6 [shape = 's32[1]{0}', space=sflag, size = 0x4, scoped, tag = 'scoped memory for tpu_custom_call.1']
    #allocation7 [shape = 'u8[512]{0}', space=smem, size = 0x200, scoped, tag = 'output window, operand 0, single buffered']
    %7 = vsyncpa [#allocation3], 0
    %8 = vsyncpa [#allocation6], 0
    %9 = vsyncpa [#allocation4], 0
    // Predicated region
    $region2: #{tpu_custom_call.1} parent=1 // pred_check
      _
    $region3: #{tpu_custom_call.1} parent=1 // pred_check_branch
      %11 = sbr.rel (0) target = $region5
    $region4: #{tpu_custom_call.1} parent=1 // pred_region
      %s13 = ssub.s32 256, 256
      %14 = vsyncadd [#allocation3], %s13
      %s15 = sshll.u32 [#allocation2], 4
      %s16 = int_to_ptr.vmem [resolvable:$true] %s15
      %21 = dma.hbm_to_vmem [thread:$0]  %s0, 256, %s16, [#allocation3], 128, 128, 8
    $region5: #{tpu_custom_call.1} parent=1 // pred_fallthru
      _
    // Predicated region
    $region6: #{tpu_custom_call.1} parent=1 // pred_check
      _
    $region7: #{tpu_custom_call.1} parent=1 // pred_check_branch
      %23 = sbr.rel (0) target = $region9
    $region8: #{tpu_custom_call.1} parent=1 // pred_region
      %s25 = ssub.s32 256, 256
      %26 = vsyncadd [#allocation6], %s25
      %s27 = sshll.u32 [#allocation5], 4
      %s28 = int_to_ptr.vmem [resolvable:$true] %s27
      %33 = dma.hbm_to_vmem [thread:$0]  %s1, 256, %s28, [#allocation6], 128, 128, 8
    $region9: #{tpu_custom_call.1} parent=1 // pred_fallthru
      _
    // Predicated region
    $region10: #{tpu_custom_call.1} parent=1 // pred_check
      _
    $region11: #{tpu_custom_call.1} parent=1 // pred_check_branch
      %35 = sbr.rel (0) target = $region13
    $region12: #{tpu_custom_call.1} parent=1 // pred_region
      %36 = dma.done [#allocation3], 256
    $region13: #{tpu_custom_call.1} parent=1 // pred_fallthru
      _
    // Predicated region
    $region14: #{tpu_custom_call.1} parent=1 // pred_check
      _
    $region15: #{tpu_custom_call.1} parent=1 // pred_check_branch
      %38 = sbr.rel (0) target = $region17
    $region16: #{tpu_custom_call.1} parent=1 // pred_region
      %39 = dma.done [#allocation6], 256
    $region17: #{tpu_custom_call.1} parent=1 // pred_fallthru
      _
    %v40 = vld [vmem:[#allocation2] sm:$0xff]
    %v41 = vld [vmem:[#allocation2 + $0x8] sm:$0xff]
    %v42 = vld [vmem:[#allocation5] sm:$0xff]
    %v43 = vld [vmem:[#allocation5 + $0x8] sm:$0xff]
    %v44 = vand.u32 2147483647, %v40
    %v45 = vand.u32 2147483647, %v41
    %v46 = vsub.f32 0.0, %v44
    %v47 = vsub.f32 0.0, %v45
    %v48 = vmul.f32 %v46, 1.442695
    %v49 = vpow.pop %v48
    %v50 = vmul.f32 %v47, 1.442695
    %v51 = vpow.pop %v50
    %v52 = vadd.f32 %v49, 1.0
    %v53 = vadd.f32 %v51, 1.0
    %v54 = vrcp.pop %v52
    %v55 = vmul.f32 1.0, %v54
    %v56 = vrcp.pop %v53
    %v57 = vmul.f32 1.0, %v56
    %vm58 = vcmp.ge.f32.partialorder %v40, 0.0
    %vm59 = vcmp.ge.f32.partialorder %v41, 0.0
    %v60 = vmul.f32 %v49, %v55
    %v61 = vmul.f32 %v51, %v57
    %v62 = vsel %vm58, %v55, %v60
    %v63 = vsel %vm59, %v57, %v61
    %v64 = vmax.f32 %v40, -100.0
    %v65 = vmax.f32 %v41, -100.0
    %v66 = vmin.f32 %v64, 100.0
    %v67 = vmin.f32 %v65, 100.0
    %v68 = vmax.f32 %v66, 0.0
    %v69 = vmax.f32 %v67, 0.0
    %v70 = vmul.f32 %v66, %v42
    %v71 = vmul.f32 %v67, %v43
    %v72 = vsub.f32 %v68, %v70
    %v73 = vsub.f32 %v69, %v71
    %v74 = vadd.f32 %v49, 1.0
    %v75 = vlog2.pop %v74
    %v76 = vmul.f32 %v75, 0.6931472
    %v77 = vmul.f32 -0.5, %v49
    %v78 = vadd.f32 %v77, 1.0
    %v79 = vmul.f32 %v78, %v49
    %v80 = vand.u32 2147483647, %v49
    %vm81 = vcmp.lt.f32.partialorder %v80, 0.0004427343
    %v82 = vsel %vm81, %v79, %v76
    %v83 = vadd.f32 %v51, 1.0
    %v84 = vlog2.pop %v83
    %v85 = vmul.f32 %v84, 0.6931472
    %v86 = vmul.f32 -0.5, %v51
    %v87 = vadd.f32 %v86, 1.0
    %v88 = vmul.f32 %v87, %v51
    %v89 = vand.u32 2147483647, %v51
    %vm90 = vcmp.lt.f32.partialorder %v89, 0.0004427343
    %v91 = vsel %vm90, %v88, %v85
    %v92 = vadd.f32 %v72, %v82
    %v93 = vadd.f32 %v73, %v91
    %v94 = vmul.f32 %v62, %v42
    %v95 = vmul.f32 %v63, %v43
    %v96 = vadd.f32 %v94, %v95
    %97 = vadd.xlane.f32.xlu0 %v96
    %v98 = vpop.xlane.xlu0 %97
    %v99 = vrot.slane %v98, 4
    %v100 = vadd.f32 %v98, %v99
    %v101 = vrot.slane %v100, 2
    %v102 = vadd.f32 %v100, %v101
    %v103 = vrot.slane %v102, 1
    %v104 = vadd.f32 %v102, %v103
    %s105 = vtos %v104
    %v106 = vadd.f32 %v62, %v42
    %v107 = vadd.f32 %v63, %v43
    %v108 = vadd.f32 %v106, %v107
    %109 = vadd.xlane.f32.xlu0 %v108
    %v110 = vpop.xlane.xlu0 %109
    %v111 = vrot.slane %v110, 4
    %v112 = vadd.f32 %v110, %v111
    %v113 = vrot.slane %v112, 2
    %v114 = vadd.f32 %v112, %v113
    %v115 = vrot.slane %v114, 1
    %v116 = vadd.f32 %v114, %v115
    %s117 = vtos %v116
    %v118 = vadd.f32 %v92, %v93
    %119 = vadd.xlane.f32.xlu0 %v118
    %v120 = vpop.xlane.xlu0 %119
    %v121 = vrot.slane %v120, 4
    %v122 = vadd.f32 %v120, %v121
    %v123 = vrot.slane %v122, 2
    %v124 = vadd.f32 %v122, %v123
    %v125 = vrot.slane %v124, 1
    %v126 = vadd.f32 %v124, %v125
    %s127 = vtos %v126
    %s128 = scalar_lea.smem [#allocation7], 0
    %129 = sst [smem:[%s128]] %s105
    %s130 = scalar_lea.smem [#allocation7], 1
    %131 = sst [smem:[%s130]] %s117
    %s132 = scalar_lea.smem [#allocation7], 2
    %133 = sst [smem:[%s132]] %s127
    // Predicated region
    $region18: #{tpu_custom_call.1} parent=1 // pred_check
      _
    $region19: #{tpu_custom_call.1} parent=1 // pred_check_branch
      %135 = sbr.rel (0) target = $region21
    $region20: #{tpu_custom_call.1} parent=1 // pred_region
      %s137 = ssub.s32 16, 16
      %138 = vsyncadd [#allocation4], %s137
      %141 = dma.smem_to_hbm [#allocation7], 16, %s2, [#allocation4]
    $region21: #{tpu_custom_call.1} parent=1 // pred_fallthru
      _
    // Predicated region
    $region22: #{tpu_custom_call.1} parent=1 // pred_check
      _
    $region23: #{tpu_custom_call.1} parent=1 // pred_check_branch
      %143 = sbr.rel (0) target = $region25
    $region24: #{tpu_custom_call.1} parent=1 // pred_region
      %144 = dma.done [#allocation4], 16
    $region25: #{tpu_custom_call.1} parent=1 // pred_fallthru
      _
    %145 = sfence
    %146 = vsyncpa [#allocation3], 1
    %147 = vsyncpa [#allocation6], 1
    %148 = vsyncpa [#allocation4], 1

</llo_original>
